<compile_context>
chip_gen: v7x
topology: tpu7x:2x2x1
jax: 0.10.0
libtpu: 0.0.40
codegen_flags: <defaults>
</compile_context>

<pallas_src>
import functools

import jax
import jax.numpy as jnp
from jax.experimental import pallas as pl
from jax.experimental.pallas import tpu as pltpu


# --------------------------------------------------------------------------- #
# Generation-aware budgets
# --------------------------------------------------------------------------- #
def _vmem_capacity_bytes():
    # 128 MiB on v5e/v6e, 64 MiB on v7x.  Fall back conservatively if the query
    # is unavailable (e.g. interpret mode / older runtime).
    try:
        return int(pltpu.get_tpu_info().vmem_capacity_bytes)
    except Exception:
        return 64 * 1024 * 1024


def _budgets():
    cap = _vmem_capacity_bytes()
    # Scoped VMEM limit we request from Mosaic: 3/4 of physical, clamped.
    vmem_limit = int(min(max(cap * 3 // 4, 32 * 2**20), 100 * 2**20))
    # f32 working bytes per streaming block (norm pass holds ~6x this with
    # double-buffered in+out plus f32 temps): 4 MiB on v7x, 8 MiB on v5e/v6e.
    block_budget = int(min(max(vmem_limit // 12, 4 * 2**20), 8 * 2**20))
    # Fused-path footprint budget (input + output + f32 copy + f32 temps).
    fused_budget = int(vmem_limit * 7 // 10)
    return vmem_limit, block_budget, fused_budget


# --------------------------------------------------------------------------- #
# Kernels
# --------------------------------------------------------------------------- #
def _fused_kernel(x_ref, w_ref, b_ref, o_ref, *, eps, count):
    # x_ref: (G, RC, HW) resident in VMEM; w_ref/b_ref: (RC, 1) per-proxy-channel
    # affine params.  Single pass: x is read from HBM exactly once.
    x = x_ref[...].astype(jnp.float32)
    s = jnp.sum(x, axis=(0, 2), keepdims=True)              # (1, RC, 1)
    ss = jnp.sum(x * x, axis=(0, 2), keepdims=True)         # (1, RC, 1)
    inv_n = 1.0 / count
    mean = s * inv_n
    # clamp: E[x^2]-E[x]^2 can go slightly negative from cancellation
    var = jnp.maximum(ss * inv_n - mean * mean, 0.0)
    rstd = jax.lax.rsqrt(var + eps)
    scale = w_ref[...].astype(jnp.float32)[None] * rstd     # (1, RC, 1)
    shift = b_ref[...].astype(jnp.float32)[None] - mean * scale
    o_ref[...] = (x * scale + shift).astype(o_ref.dtype)


def _stats_kernel(x_ref, w_ref, b_ref, scale_ref, shift_ref, *, eps, count):
    # Pass 1 of tiled path, grid = (rc-blocks, G, HW-blocks).
    # scale_ref/shift_ref are the resident (rc_tile, 1) accumulators for this
    # rc-block (sum and sum-of-squares during accumulation); finalize folds the
    # BN stats and the per-channel affine into the final scale/shift in-kernel,
    # so no host-side glue ops sit between the two pallas_calls.
    gi = pl.program_id(1)
    mi = pl.program_id(2)

    @pl.when((gi == 0) & (mi == 0))
    def _init():
        scale_ref[...] = jnp.zeros_like(scale_ref)
        shift_ref[...] = jnp.zeros_like(shift_ref)

    x = x_ref[0].astype(jnp.float32)                         # (rc_tile, hw_tile)
    scale_ref[...] += jnp.sum(x, axis=1, keepdims=True)      # running sum
    shift_ref[...] += jnp.sum(x * x, axis=1, keepdims=True)  # running sumsq

    @pl.when((gi == pl.num_programs(1) - 1) & (mi == pl.num_programs(2) - 1))
    def _finalize():
        # TODO(synk): E[x^2]-E[x]^2 in f32 can lose precision vs PyTorch's
        # Welford accumulation for |mean| >> std; a block-merged Welford pass
        # would be more robust.
        inv_n = 1.0 / count
        mu = scale_ref[...] * inv_n
        var = jnp.maximum(shift_ref[...] * inv_n - mu * mu, 0.0)
        rstd = jax.lax.rsqrt(var + eps)
        sc = w_ref[...] * rstd
        scale_ref[...] = sc                                  # output 0 -> scale
        shift_ref[...] = b_ref[...] - mu * sc                # output 1 -> shift


def _norm_kernel(x_ref, scale_ref, shift_ref, o_ref):
    # Pass 2 of tiled path: out = x * scale + shift, lane-dense blocks.
    x = x_ref[...].astype(jnp.float32)                       # (1, rc_tile, hw_tile)
    scale = scale_ref[...][None]                             # (1, rc_tile, 1)
    shift = shift_ref[...][None]
    o_ref[...] = (x * scale + shift).astype(o_ref.dtype)


# --------------------------------------------------------------------------- #
# Tile selection (hardened for large r*C and awkward H*W)
# --------------------------------------------------------------------------- #
def _pick_tiles(rc, hw, block_budget_bytes):
    """Pick (rc_tile, hw_tile): divisors of rc / hw that are multiples of
    8 / 128 (or the full dim), maximizing the f32 block footprint under the
    budget, preferring lane-dense (wide hw) blocks.  Never silently produces a
    full (rc, H*W) block that would blow scoped VMEM."""
    target_elems = max(block_budget_bytes // 4, 8 * 128)

    def options(n, quantum):
        opts = {n}
        t = quantum
        while t < n:
            if n % t == 0:
                opts.add(t)
            t += quantum
        return sorted(opts)

    hw_opts = options(hw, 128)
    rc_opts = options(rc, 8)

    feasible = []
    for ht in hw_opts:
        for rt in rc_opts:
            if rt * ht <= target_elems:
                feasible.append((rt * ht, ht, rt))
    if feasible:
        _, ht, rt = max(feasible, key=lambda z: (z[0], z[1]))
        return rt, ht
    # Nothing fits the budget (tiny budget / awkward dims): smallest block.
    return rc_opts[0], hw_opts[0]


# --------------------------------------------------------------------------- #
# Wrapper
# --------------------------------------------------------------------------- #
def ghost_bn2d_adv(x, weight=None, bias=None, *,
                   virtual2actual_batch_size_ratio=2, eps=1e-5,
                   max_fused_bytes=None, hw_tile=None, rc_tile=None):
    n, c, h, w = x.shape
    r = virtual2actual_batch_size_ratio
    if n % r != 0:
        raise RuntimeError("batch size must be divisible by the virtual/actual ratio")
    g = n // r
    rc = r * c
    hw = h * w
    count = float(g * hw)                 # elements reduced per proxy channel
    itemsize = jnp.dtype(x.dtype).itemsize

    vmem_limit, block_budget, fused_budget = _budgets()
    if max_fused_bytes is None:
        max_fused_bytes = fused_budget

    # (N, C, H, W) -> (G, r*C, H*W): contiguous regrouping, zero data movement.
    x4 = x.reshape(g, rc, hw)

    # Per-proxy-channel affine params: proxy channel p = j*C + cc uses weight[cc].
    if weight is None:
        weight = jnp.ones((c,), jnp.float32)    # affine=False -> identity
    if bias is None:
        bias = jnp.zeros((c,), jnp.float32)
    w_rc = jnp.tile(weight.astype(jnp.float32), r).reshape(rc, 1)
    b_rc = jnp.tile(bias.astype(jnp.float32), r).reshape(rc, 1)

    # Fused-path VMEM footprint: in + out buffers (native dtype) + f32 working
    # copy + f32 temps (x*x, x*scale+shift).
    fused_footprint = x.size * (2 * itemsize + 12) + rc * 16

    if fused_footprint <= max_fused_bytes:
        # ---------------- fused single-pass path (x read from HBM once) -------
        out4 = pl.pallas_call(
            functools.partial(_fused_kernel, eps=eps, count=count),
            out_shape=jax.ShapeDtypeStruct((g, rc, hw), x.dtype),
            compiler_params=pltpu.CompilerParams(vmem_limit_bytes=vmem_limit),
        )(x4, w_rc, b_rc)
        # TODO(synk): for tensors near the threshold a pipelined fused variant
        # (grid over HW blocks + persistent VMEM cache) would overlap DMA and
        # compute; the serialized big-block version is still 1-read/1-write.
    else:
        # ---------------- tiled two-pass path ---------------------------------
        auto_rc, auto_hw = _pick_tiles(rc, hw, block_budget)
        if rc_tile is None:
            rc_tile = auto_rc
        if hw_tile is None:
            hw_tile = auto_hw
        if hw % hw_tile != 0:
            raise ValueError("hw_tile must divide H*W")
        if rc % rc_tile != 0:
            raise ValueError("rc_tile must divide r*C")
        n_hw = hw // hw_tile
        n_rc = rc // rc_tile

        x_spec = pl.BlockSpec((1, rc_tile, hw_tile), lambda ri, gi, mi: (gi, ri, mi))
        ch_spec = pl.BlockSpec((rc_tile, 1), lambda ri, gi, mi: (ri, 0))

        # Pass 1: per-proxy-channel stats, folded into final scale/shift
        # inside the kernel (no host-side glue ops between the two calls).
        scale, shift = pl.pallas_call(
            functools.partial(_stats_kernel, eps=eps, count=count),
            out_shape=(jax.ShapeDtypeStruct((rc, 1), jnp.float32),
                       jax.ShapeDtypeStruct((rc, 1), jnp.float32)),
            grid_spec=pltpu.PrefetchScalarGridSpec(
                num_scalar_prefetch=0,
                grid=(n_rc, g, n_hw),
                in_specs=[x_spec, ch_spec, ch_spec],
                out_specs=[ch_spec, ch_spec],
            ),
            compiler_params=pltpu.CompilerParams(
                dimension_semantics=("parallel", "arbitrary", "arbitrary"),
                vmem_limit_bytes=vmem_limit),
        )(x4, w_rc, b_rc)

        # Pass 2: streamed normalize over lane-dense (1, rc_tile, hw_tile) blocks.
        out4 = pl.pallas_call(
            _norm_kernel,
            out_shape=jax.ShapeDtypeStruct((g, rc, hw), x.dtype),
            grid_spec=pltpu.PrefetchScalarGridSpec(
                num_scalar_prefetch=0,
                grid=(n_rc, g, n_hw),
                in_specs=[x_spec, ch_spec, ch_spec],
                out_specs=x_spec,
            ),
            compiler_params=pltpu.CompilerParams(
                dimension_semantics=("parallel", "parallel", "parallel"),
                vmem_limit_bytes=vmem_limit),
        )(x4, scale, shift)

    # (G, r*C, H*W) -> (N, C, H, W): contiguous regrouping, zero data movement.
    return out4.reshape(n, c, h, w)


# --------------------------------------------------------------------------- #
# Pure-JAX reference
# --------------------------------------------------------------------------- #
def _reference(x, weight, bias, r, eps):
    n, c, h, w = x.shape
    proxy = x.reshape(n // r, r * c, h, w).astype(jnp.float32)
    mean = proxy.mean(axis=(0, 2, 3), keepdims=True)
    var = ((proxy - mean) ** 2).mean(axis=(0, 2, 3), keepdims=True)
    out = (proxy - mean) / jnp.sqrt(var + eps)
    out = out.reshape(n, c, h, w)
    return (out * weight.reshape(1, -1, 1, 1)
            + bias.reshape(1, -1, 1, 1)).astype(x.dtype)


if __name__ == "__main__":
    # Module config (defaults): num_features=4, ratio=2, affine=False.
    num_features = 4
    ratio = 2
    eps = 1e-5

    key = jax.random.PRNGKey(0)
    x = jax.random.normal(key, (2, num_features, 16, 16), dtype=jnp.float32)

    # affine=False -> weight/bias are None in the module; identity affine here.
    weight = jnp.ones((num_features,), jnp.float32)
    bias = jnp.zeros((num_features,), jnp.float32)

    # Small input -> fused single-pass kernel.
    out = ghost_bn2d_adv(x, weight, bias,
                         virtual2actual_batch_size_ratio=ratio, eps=eps)
    out = jax.block_until_ready(out)
    ref = _reference(x, weight, bias, ratio, eps)
    assert out.shape == x.shape and out.dtype == x.dtype
    assert jnp.allclose(out, ref, atol=1e-4, rtol=1e-4)

    # Force the tiled two-pass path (multi-step grid over G and HW blocks).
    x2 = jax.random.normal(jax.random.PRNGKey(1),
                           (8, num_features, 32, 32), dtype=jnp.float32)
    out2 = ghost_bn2d_adv(x2, weight, bias,
                          virtual2actual_batch_size_ratio=ratio, eps=eps,
                          max_fused_bytes=0, hw_tile=128)
    out2 = jax.block_until_ready(out2)
    ref2 = _reference(x2, weight, bias, ratio, eps)
    assert jnp.allclose(out2, ref2, atol=1e-4, rtol=1e-4)

    # Exercise the rc-tiled tiled path (multiple rc blocks with per-block
    # resident accumulators) at a small size.
    c3 = 16
    x3 = jax.random.normal(jax.random.PRNGKey(2), (4, c3, 16, 16), dtype=jnp.float32)
    w3 = jnp.ones((c3,), jnp.float32)
    b3 = jnp.zeros((c3,), jnp.float32)
    out3 = ghost_bn2d_adv(x3, w3, b3,
                          virtual2actual_batch_size_ratio=ratio, eps=eps,
                          max_fused_bytes=0, hw_tile=128, rc_tile=8)
    out3 = jax.block_until_ready(out3)
    ref3 = _reference(x3, w3, b3, ratio, eps)
    assert jnp.allclose(out3, ref3, atol=1e-4, rtol=1e-4)

    # TODO(synk): eval-mode path using running stats (and the running-stat /
    # momentum updates) is not implemented; only the training/batch-stats
    # forward is covered.
    print("KERNEL_OK")
</pallas_src>

<mosaic_0001>
module attributes {stable_mosaic.version = 11 : i64} {
  func.func @_fused_kernel(%arg0: memref<1x8x256xf32, #tpu.memory_space<vmem>>, %arg1: memref<8x1xf32, #tpu.memory_space<vmem>>, %arg2: memref<8x1xf32, #tpu.memory_space<vmem>>, %arg3: memref<1x8x256xf32, #tpu.memory_space<vmem>>) attributes {dimension_semantics = [], scalar_prefetch = 0 : i64, scratch_operands = 0 : i64, tpu.core_type = #tpu.core_type<tc>} {
    %c0 = arith.constant 0 : index
    %c0_0 = arith.constant 0 : index
    %c0_1 = arith.constant 0 : index
    %0 = vector.load %arg0[%c0, %c0_0, %c0_1] : memref<1x8x256xf32, #tpu.memory_space<vmem>>, vector<1x8x256xf32>
    %cst = arith.constant dense<0.000000e+00> : vector<8xf32>
    %1 = vector.multi_reduction <add>, %0, %cst [0, 2] : vector<1x8x256xf32> to vector<8xf32>
    %2 = vector.shape_cast %1 : vector<8xf32> to vector<1x8x1xf32>
    %3 = arith.mulf %0, %0 : vector<1x8x256xf32>
    %cst_2 = arith.constant dense<0.000000e+00> : vector<8xf32>
    %4 = vector.multi_reduction <add>, %3, %cst_2 [0, 2] : vector<1x8x256xf32> to vector<8xf32>
    %5 = vector.shape_cast %4 : vector<8xf32> to vector<1x8x1xf32>
    %cst_3 = arith.constant 3.906250e-03 : f32
    %6 = vector.broadcast %cst_3 : f32 to vector<1x8x1xf32>
    %7 = arith.mulf %2, %6 : vector<1x8x1xf32>
    %cst_4 = arith.constant 3.906250e-03 : f32
    %8 = vector.broadcast %cst_4 : f32 to vector<1x8x1xf32>
    %9 = arith.mulf %5, %8 : vector<1x8x1xf32>
    %10 = arith.mulf %7, %7 : vector<1x8x1xf32>
    %11 = arith.subf %9, %10 : vector<1x8x1xf32>
    %cst_5 = arith.constant 0.000000e+00 : f32
    %12 = vector.broadcast %cst_5 : f32 to vector<1x8x1xf32>
    %13 = arith.maximumf %11, %12 : vector<1x8x1xf32>
    %cst_6 = arith.constant 9.99999974E-6 : f32
    %14 = vector.broadcast %cst_6 : f32 to vector<1x8x1xf32>
    %15 = arith.addf %13, %14 : vector<1x8x1xf32>
    %16 = math.rsqrt %15 : vector<1x8x1xf32>
    %c0_7 = arith.constant 0 : index
    %c0_8 = arith.constant 0 : index
    %17 = vector.load %arg1[%c0_7, %c0_8] : memref<8x1xf32, #tpu.memory_space<vmem>>, vector<8x1xf32>
    %18 = vector.shape_cast %17 : vector<8x1xf32> to vector<1x8x1xf32>
    %19 = arith.mulf %18, %16 : vector<1x8x1xf32>
    %c0_9 = arith.constant 0 : index
    %c0_10 = arith.constant 0 : index
    %20 = vector.load %arg2[%c0_9, %c0_10] : memref<8x1xf32, #tpu.memory_space<vmem>>, vector<8x1xf32>
    %21 = vector.shape_cast %20 : vector<8x1xf32> to vector<1x8x1xf32>
    %22 = arith.mulf %7, %19 : vector<1x8x1xf32>
    %23 = arith.subf %21, %22 : vector<1x8x1xf32>
    %24 = vector.broadcast %19 : vector<1x8x1xf32> to vector<1x8x256xf32>
    %25 = arith.mulf %0, %24 : vector<1x8x256xf32>
    %26 = vector.broadcast %23 : vector<1x8x1xf32> to vector<1x8x256xf32>
    %27 = arith.addf %25, %26 : vector<1x8x256xf32>
    %c0_11 = arith.constant 0 : index
    %c0_12 = arith.constant 0 : index
    %c0_13 = arith.constant 0 : index
    %28 = vector.load %arg3[%c0_11, %c0_12, %c0_13] : memref<1x8x256xf32, #tpu.memory_space<vmem>>, vector<1x8x256xf32>
    tpu.vector_store %arg3[%c0_11, %c0_12, %c0_13], %27 {strides = array<i32>} : memref<1x8x256xf32, #tpu.memory_space<vmem>>, vector<1x8x256xf32>,
    return
  }
}

</mosaic_0001>

<llo_original>
// kernel: tpu_custom_call.1
$region0: #{tpu_custom_call.1}
  #allocation0 [shape = 'u32[]', space=smem, size = 0x4, offset = 0x4, fixed_abs, tag = 'smem constant byte address 0x4 - core index']
  #allocation1 [shape = 'u32[144,128]{1,0:T(1,128)}', space=vmem, size = 0x12000, scoped, tag = 'internal scratch']
  %s0 = inlined_call_operand.vmem [shape: f32[1,8,256], index: 0, kind: input, shape index: {}]
  %s1 = inlined_call_operand.vmem [shape: f32[8,1], index: 1, kind: input, shape index: {}]
  %s2 = inlined_call_operand.vmem [shape: f32[8,1], index: 2, kind: input, shape index: {}]
  %s3 = inlined_call_operand.hbm [shape: f32[1,8,256], index: 3, kind: output, shape index: {}]
  %s4 = sld [smem:[#allocation0]]
  $region22: #{tpu_custom_call.1} parent=0
    _
  %s6 = ssub.s32 1, %s4
  %s7 = scalar_select 0, %s6, %s4
  $region1: #{tpu_custom_call.1} parent=0
    #allocation2 [shape = 'u8[8192]{0}', space=vmem, size = 0x2000, scoped, tag = 'output window, operand 0, single buffered']
    #allocation3 [shape = 's32[1]{0}', space=sflag, size = 0x4, scoped, tag = 'scoped memory for tpu_custom_call.1']
    %8 = vsyncpa [#allocation3], 0
    // Predicated region
    $region2: #{tpu_custom_call.1} parent=1 // pred_check
      _
    $region3: #{tpu_custom_call.1} parent=1 // pred_check_branch
      %10 = sbr.rel (0) target = $region5
    $region4: #{tpu_custom_call.1} parent=1 // pred_region
      _
    $region5: #{tpu_custom_call.1} parent=1 // pred_fallthru
      _
    // Predicated region
    $region6: #{tpu_custom_call.1} parent=1 // pred_check
      _
    $region7: #{tpu_custom_call.1} parent=1 // pred_check_branch
      %12 = sbr.rel (0) target = $region9
    $region8: #{tpu_custom_call.1} parent=1 // pred_region
      _
    $region9: #{tpu_custom_call.1} parent=1 // pred_fallthru
      _
    // Predicated region
    $region10: #{tpu_custom_call.1} parent=1 // pred_check
      _
    $region11: #{tpu_custom_call.1} parent=1 // pred_check_branch
      %14 = sbr.rel (0) target = $region13
    $region12: #{tpu_custom_call.1} parent=1 // pred_region
      _
    $region13: #{tpu_custom_call.1} parent=1 // pred_fallthru
      _
    %v15 = vld [vmem:[%s0] sm:$0xff]
    %v16 = vld [vmem:[%s0 + $0x8] sm:$0xff]
    %v17 = vadd.f32 %v15, %v16
    %18 = vadd.xlane.f32.xlu0 %v17
    %v19 = vpop.xlane.xlu0 %18
    %v20 = vmul.f32 %v15, %v15
    %v21 = vmul.f32 %v16, %v16
    %v22 = vadd.f32 %v20, %v21
    %23 = vadd.xlane.f32.xlu0 %v22
    %v24 = vpop.xlane.xlu0 %23
    %v25 = vmul.f32 %v19, 0.00390625
    %v26 = vmul.f32 %v24, 0.00390625
    %v27 = vmul.f32 %v25, %v25
    %v28 = vsub.f32 %v26, %v27
    %v29 = vmax.f32 %v28, 0.0
    %v30 = vadd.f32 %v29, 1e-05
    %v31 = vrsqrt.pop %v30
    %v32 = vld [vmem:[%s1] sm:$0xff]
    %v33 = vmul.f32 %v32, %v31
    %v34 = vld [vmem:[%s2] sm:$0xff]
    %v35 = vmul.f32 %v25, %v33
    %v36 = vsub.f32 %v34, %v35
    %38 = vset.pattern.permute.xlu0 0
    %39 = vperm.xlu0 %38, %v33
    %v40 = vpop.permute.xlu0 %39
    %v42 = vmul.f32 %v15, %v40
    %v43 = vmul.f32 %v16, %v40
    %45 = vset.pattern.permute.xlu0 0
    %46 = vperm.xlu0 %45, %v36
    %v47 = vpop.permute.xlu0 %46
    %v49 = vadd.f32 %v42, %v47
    %v50 = vadd.f32 %v43, %v47
    %51 = vst [vmem:[#allocation2] sm:$0xff] %v49
    %52 = vst [vmem:[#allocation2 + $0x8] sm:$0xff] %v50
    // Predicated region
    $region14: #{tpu_custom_call.1} parent=1 // pred_check
      _
    $region15: #{tpu_custom_call.1} parent=1 // pred_check_branch
      %54 = sbr.rel (0) target = $region17
    $region16: #{tpu_custom_call.1} parent=1 // pred_region
      %s56 = ssub.s32 256, 256
      %57 = vsyncadd [#allocation3], %s56
      %s59 = sshll.u32 [#allocation2], 4
      %s60 = int_to_ptr.vmem [resolvable:$true] %s59
      %62 = dma.vmem_to_hbm [thread:$0]  %s60, 256, %s3, [#allocation3]
    $region17: #{tpu_custom_call.1} parent=1 // pred_fallthru
      _
    // Predicated region
    $region18: #{tpu_custom_call.1} parent=1 // pred_check
      _
    $region19: #{tpu_custom_call.1} parent=1 // pred_check_branch
      %64 = sbr.rel (0) target = $region21
    $region20: #{tpu_custom_call.1} parent=1 // pred_region
      %65 = dma.done [#allocation3], 256
    $region21: #{tpu_custom_call.1} parent=1 // pred_fallthru
      _
    %66 = vsyncpa [#allocation3], 1

</llo_original>
